<compile_context>
chip_gen: v6e
topology: v6e:2x2x1
jax: 0.10.0
libtpu: 0.0.40
codegen_flags: <defaults>
</compile_context>

<pallas_src>
import functools

import jax
import jax.numpy as jnp
from jax.experimental import pallas as pl
from jax.experimental.pallas import tpu as pltpu


_MASK_VALUE = jnp.float32(-1e30)   # large finite negative (avoids -inf NaN path)

_SUBLANE_TILES = (512, 256, 128, 64, 32, 16, 8)
_LANE_TILES = (512, 256, 128)


def _pick_tile(dim, candidates):
    """Largest candidate that exactly divides `dim`, else the full dim."""
    for c in candidates:
        if dim % c == 0:
            return c
    return dim


# ----------------------------- linear kernel --------------------------------
def _linear_kernel(x_ref, w_ref, b_ref, o_ref, acc_ref):
    @pl.when(pl.program_id(2) == 0)
    def _():
        acc_ref[...] = jnp.zeros_like(acc_ref)

    acc_ref[...] += jnp.dot(x_ref[...], w_ref[...],
                            preferred_element_type=jnp.float32)

    @pl.when(pl.program_id(2) == pl.num_programs(2) - 1)
    def _():
        o_ref[...] = (acc_ref[...] + b_ref[...]).astype(o_ref.dtype)


def linear_pallas(x, w_t, b_row):
    """x @ w_t + b_row.   x: (N, Din), w_t: (Din, Dout), b_row: (1, Dout)."""
    N, Din = x.shape
    Dout = w_t.shape[1]
    tm = _pick_tile(N, _SUBLANE_TILES)
    tn = _pick_tile(Dout, _LANE_TILES)
    tk = _pick_tile(Din, _LANE_TILES)
    grid = (N // tm, Dout // tn, Din // tk)
    return pl.pallas_call(
        _linear_kernel,
        out_shape=jax.ShapeDtypeStruct((N, Dout), x.dtype),
        grid=grid,
        in_specs=[pl.BlockSpec((tm, tk), lambda i, j, k: (i, k)),
                  pl.BlockSpec((tk, tn), lambda i, j, k: (k, j)),
                  pl.BlockSpec((1, tn), lambda i, j, k: (0, j))],
        out_specs=pl.BlockSpec((tm, tn), lambda i, j, k: (i, j)),
        scratch_shapes=[pltpu.VMEM((tm, tn), jnp.float32)],
        compiler_params=pltpu.CompilerParams(
            dimension_semantics=("parallel", "parallel", "arbitrary")),
    )(x, w_t, b_row)


# --------------------------- attention kernel --------------------------------
def _mha_kernel(q_ref, k_ref, v_ref, am_ref, kp_ref, o_ref, *, scale):
    # One batch element per grid step, all heads at once (amortizes per-step
    # overhead, batched MXU matmuls, lane-dense HBM writeback per block).
    q = q_ref[0]                                   # (H, Lq, Dh)
    q = q * q.dtype.type(scale)                    # scale q (matches torch)
    k = k_ref[0]                                   # (H, Lk, Dh)
    v = v_ref[0]                                   # (H, Lk, Dh)

    # Combine the small masks on the fly; the (B, Lq, Lk) bias never exists.
    bias = am_ref[...] + kp_ref[0]                 # (Lq, Lk), finite-negative

    # Batched QK^T contracting the head dim directly (no k.T transpose copy).
    s = jnp.einsum('hqd,hkd->hqk', q, k,
                   preferred_element_type=jnp.float32)     # (H, Lq, Lk) f32
    s = s + bias[None, :, :]

    m = jnp.max(s, axis=-1, keepdims=True)
    p = jnp.exp(s - m)
    denom = jnp.sum(p, axis=-1, keepdims=True)
    inv = pl.reciprocal(denom, approx=True)        # EUP slot, off the VALU path

    o = jnp.einsum('hqk,hkd->hqd', p.astype(v.dtype), v,
                   preferred_element_type=jnp.float32)      # (H, Lq, Dh) f32
    o_ref[0] = (o * inv).astype(o_ref.dtype)


def attention_core(q, k, v, attn_bias, kp_bias):
    """q: (B,H,Lq,Dh); k,v: (B,H,Lk,Dh); attn_bias: (Lq,Lk); kp_bias: (B,1,Lk)."""
    B, H, Lq, Dh = q.shape
    Lk = k.shape[2]
    kernel = functools.partial(_mha_kernel, scale=1.0 / (Dh ** 0.5))
    return pl.pallas_call(
        kernel,
        out_shape=jax.ShapeDtypeStruct((B, H, Lq, Dh), q.dtype),
        grid=(B,),
        in_specs=[pl.BlockSpec((1, H, Lq, Dh), lambda b: (b, 0, 0, 0)),
                  pl.BlockSpec((1, H, Lk, Dh), lambda b: (b, 0, 0, 0)),
                  pl.BlockSpec((1, H, Lk, Dh), lambda b: (b, 0, 0, 0)),
                  pl.BlockSpec((Lq, Lk), lambda b: (0, 0)),
                  pl.BlockSpec((1, 1, Lk), lambda b: (b, 0, 0))],
        out_specs=pl.BlockSpec((1, H, Lq, Dh), lambda b: (b, 0, 0, 0)),
        compiler_params=pltpu.CompilerParams(
            dimension_semantics=("parallel",)),
    )(q, k, v, attn_bias, kp_bias)


# ------------------------------ module ---------------------------------------
class TransformerAttentionPallas:
    """Mirrors TransformerAttention(d_model, h, dropout) forward (eval mode)."""

    def __init__(self, d_model: int, h: int, dropout: float, key) -> None:
        assert d_model % h == 0
        self.d_model = d_model
        self.h = h
        self.dropout = dropout  # attention dropout is inactive in eval mode
        k1, k2, k3, k4 = jax.random.split(key, 4)
        init_scale = 0.02
        D = d_model
        # torch parameter shapes:
        #   in_proj_weight (3*d_model, d_model), in_proj_bias (3*d_model,)
        #   out_proj.weight (d_model, d_model), out_proj.bias (d_model,)
        in_proj_weight = init_scale * jax.random.normal(k1, (3 * D, D), jnp.float32)
        in_proj_bias = init_scale * jax.random.normal(k2, (3 * D,), jnp.float32)
        out_proj_weight = init_scale * jax.random.normal(k3, (D, D), jnp.float32)
        out_proj_bias = init_scale * jax.random.normal(k4, (D,), jnp.float32)

        # Pre-transposed weights, stored once (Din, Dout): no per-call w.T.
        self.w_in_t = jnp.asarray(in_proj_weight.T)        # (D, 3D) stacked QKV
        self.b_in = in_proj_bias.reshape(1, 3 * D)
        self.w_q_t = self.w_in_t[:, :D]
        self.w_k_t = self.w_in_t[:, D:2 * D]
        self.w_v_t = self.w_in_t[:, 2 * D:]
        self.w_kv_t = self.w_in_t[:, D:]
        self.b_q = self.b_in[:, :D]
        self.b_k = self.b_in[:, D:2 * D]
        self.b_v = self.b_in[:, 2 * D:]
        self.b_kv = self.b_in[:, D:]
        self.w_out_t = jnp.asarray(out_proj_weight.T)      # (D, D)
        self.b_out = out_proj_bias.reshape(1, D)

    def __call__(self, query, key, value, key_padding_mask, attn_mask):
        D, H = self.d_model, self.h
        Dh = D // H
        B, Lq, _ = query.shape
        Lk = key.shape[1]

        xq = query.reshape(B * Lq, D)
        # ---------------- input projections ----------------
        if (query is key) and (key is value):
            # Self-attention: single fused (B*L, D) @ (D, 3D) matmul.
            qkv = linear_pallas(xq, self.w_in_t, self.b_in)       # (B*Lq, 3D)
            q, k, v = qkv[:, :D], qkv[:, D:2 * D], qkv[:, 2 * D:]
        else:
            q = linear_pallas(xq, self.w_q_t, self.b_q)
            xk = key.reshape(B * Lk, D)
            if key is value:
                kv = linear_pallas(xk, self.w_kv_t, self.b_kv)    # (B*Lk, 2D)
                k, v = kv[:, :D], kv[:, D:]
            else:
                k = linear_pallas(xk, self.w_k_t, self.b_k)
                v = linear_pallas(value.reshape(B * Lk, D), self.w_v_t, self.b_v)

        def split_heads(x, L):
            return x.reshape(B, L, H, Dh).transpose(0, 2, 1, 3)   # (B, H, L, Dh)

        qh, kh, vh = split_heads(q, Lq), split_heads(k, Lk), split_heads(v, Lk)

        # ----- masks -> small additive biases (combined inside the kernel) -----
        if attn_mask is None:
            am = jnp.zeros((Lq, Lk), jnp.float32)
        elif attn_mask.dtype == jnp.bool_:
            am = jnp.where(attn_mask, _MASK_VALUE, 0.0).astype(jnp.float32)
        else:  # float attn_mask = additive
            am = attn_mask.astype(jnp.float32)
        if key_padding_mask is None:
            kp = jnp.zeros((B, 1, Lk), jnp.float32)
        elif key_padding_mask.dtype == jnp.bool_:
            kp = jnp.where(key_padding_mask, _MASK_VALUE, 0.0
                           ).astype(jnp.float32)[:, None, :]
        else:  # float key_padding_mask = additive (torch semantics)
            kp = key_padding_mask.astype(jnp.float32)[:, None, :]

        # -------------- scaled-dot-product attention (all heads/batch) --------
        oh = attention_core(qh, kh, vh, am, kp)                   # (B, H, Lq, Dh)

        # -------------- merge heads + output projection -----------------------
        o = oh.transpose(0, 2, 1, 3).reshape(B * Lq, D)
        out = linear_pallas(o, self.w_out_t, self.b_out)
        return out.reshape(B, Lq, D)


# ------------------------------- demo -----------------------------------------
if __name__ == "__main__":
    B, L, D, H = 2, 8, 32, 4

    key = jax.random.PRNGKey(0)
    kx, kq, kkv = jax.random.split(key, 3)
    x = jax.random.normal(kx, (B, L, D), jnp.float32)

    # key_padding_mask: True = padded key position (ignored)
    key_padding_mask = jnp.zeros((B, L), jnp.bool_).at[1, -1].set(True)
    # attn_mask: causal boolean mask, True = attention not allowed
    attn_mask = jnp.triu(jnp.ones((L, L), jnp.bool_), k=1)

    mod = TransformerAttentionPallas(d_model=D, h=H, dropout=0.1,
                                     key=jax.random.PRNGKey(42))

    # Self-attention (exercises the fused-QKV projection path) with both masks.
    out = mod(x, x, x, key_padding_mask, attn_mask)
    out = jax.block_until_ready(out)
    assert out.shape == (B, L, D)
    assert bool(jnp.all(jnp.isfinite(out)))

    # Cross-attention (separate Q, fused KV path), longer key sequence, no masks.
    Lk = 16
    q_in = jax.random.normal(kq, (B, L, D), jnp.float32)
    kv_in = jax.random.normal(kkv, (B, Lk, D), jnp.float32)
    out2 = mod(q_in, kv_in, kv_in, None, None)
    out2 = jax.block_until_ready(out2)
    assert out2.shape == (B, L, D)
    assert bool(jnp.all(jnp.isfinite(out2)))

    print("KERNEL_OK")
</pallas_src>

<mosaic_0001>
module attributes {stable_mosaic.version = 11 : i64} {
  func.func @_linear_kernel(%arg0: i32, %arg1: i32, %arg2: i32, %arg3: memref<16x32xf32, #tpu.memory_space<vmem>>, %arg4: memref<32x96xf32, #tpu.memory_space<vmem>>, %arg5: memref<1x96xf32, #tpu.memory_space<vmem>>, %arg6: memref<16x96xf32, #tpu.memory_space<vmem>>, %arg7: memref<16x96xf32, #tpu.memory_space<vmem>>) attributes {dimension_semantics = [#tpu.dimension_semantics<parallel>, #tpu.dimension_semantics<parallel>, #tpu.dimension_semantics<arbitrary>], iteration_bounds = array<i64: 1, 1, 1>, scalar_prefetch = 0 : i64, scratch_operands = 1 : i64, tpu.core_type = #tpu.core_type<tc>, window_params = [{transform_indices = @transform_0, window_bounds = array<i64: 16, 32>}, {transform_indices = @transform_1, window_bounds = array<i64: 32, 96>}, {transform_indices = @transform_2, window_bounds = array<i64: 1, 96>}, {transform_indices = @transform_3, window_bounds = array<i64: 16, 96>}]} {
    %c0_i32 = arith.constant 0 : i32
    %0 = arith.cmpi eq, %arg2, %c0_i32 : i32
    %1 = arith.extui %0 : i1 to i32
    %c0_i32_0 = arith.constant 0 : i32
    %2 = arith.cmpi ne, %1, %c0_i32_0 : i32
    scf.if %2 {
      %cst_10 = arith.constant 0.000000e+00 : f32
      %12 = vector.broadcast %cst_10 : f32 to vector<16x96xf32>
      %c0_11 = arith.constant 0 : index
      %c0_12 = arith.constant 0 : index
      %13 = vector.load %arg7[%c0_11, %c0_12] : memref<16x96xf32, #tpu.memory_space<vmem>>, vector<16x96xf32>
      tpu.vector_store %arg7[%c0_11, %c0_12], %12 {strides = array<i32>} : memref<16x96xf32, #tpu.memory_space<vmem>>, vector<16x96xf32>,
    } else {
    }
    %c0 = arith.constant 0 : index
    %c0_1 = arith.constant 0 : index
    %3 = vector.load %arg7[%c0, %c0_1] : memref<16x96xf32, #tpu.memory_space<vmem>>, vector<16x96xf32>
    %c0_2 = arith.constant 0 : index
    %c0_3 = arith.constant 0 : index
    %4 = vector.load %arg3[%c0_2, %c0_3] : memref<16x32xf32, #tpu.memory_space<vmem>>, vector<16x32xf32>
    %c0_4 = arith.constant 0 : index
    %c0_5 = arith.constant 0 : index
    %5 = vector.load %arg4[%c0_4, %c0_5] : memref<32x96xf32, #tpu.memory_space<vmem>>, vector<32x96xf32>
    %cst = arith.constant dense<0.000000e+00> : vector<16x96xf32>
    %6 = tpu.matmul %4, %5, %cst {dimension_numbers = #tpu.dot_dimension_numbers<[1], [0], [0], [1], [0, 0, 1, 1], [], []>} : vector<16x32xf32>, vector<32x96xf32>, vector<16x96xf32> -> vector<16x96xf32>
    %7 = arith.addf %3, %6 : vector<16x96xf32>
    %c0_6 = arith.constant 0 : index
    %c0_7 = arith.constant 0 : index
    %8 = vector.load %arg7[%c0_6, %c0_7] : memref<16x96xf32, #tpu.memory_space<vmem>>, vector<16x96xf32>
    tpu.vector_store %arg7[%c0_6, %c0_7], %7 {strides = array<i32>} : memref<16x96xf32, #tpu.memory_space<vmem>>, vector<16x96xf32>,
    %c0_i32_8 = arith.constant 0 : i32
    %9 = arith.cmpi eq, %arg2, %c0_i32_8 : i32
    %10 = arith.extui %9 : i1 to i32
    %c0_i32_9 = arith.constant 0 : i32
    %11 = arith.cmpi ne, %10, %c0_i32_9 : i32
    scf.if %11 {
      %c0_10 = arith.constant 0 : index
      %c0_11 = arith.constant 0 : index
      %12 = vector.load %arg7[%c0_10, %c0_11] : memref<16x96xf32, #tpu.memory_space<vmem>>, vector<16x96xf32>
      %c0_12 = arith.constant 0 : index
      %c0_13 = arith.constant 0 : index
      %13 = vector.load %arg5[%c0_12, %c0_13] : memref<1x96xf32, #tpu.memory_space<vmem>>, vector<1x96xf32>
      %14 = vector.broadcast %13 : vector<1x96xf32> to vector<16x96xf32>
      %15 = arith.addf %12, %14 : vector<16x96xf32>
      %c0_14 = arith.constant 0 : index
      %c0_15 = arith.constant 0 : index
      %16 = vector.load %arg6[%c0_14, %c0_15] : memref<16x96xf32, #tpu.memory_space<vmem>>, vector<16x96xf32>
      tpu.vector_store %arg6[%c0_14, %c0_15], %15 {strides = array<i32>} : memref<16x96xf32, #tpu.memory_space<vmem>>, vector<16x96xf32>,
    } else {
    }
    return
  }
  func.func @transform_0(%arg0: i32, %arg1: i32, %arg2: i32) -> (i32, i32) {
    %c0_i32 = arith.constant 0 : i32
    return %arg0, %arg2 : i32, i32
  }
  func.func @transform_1(%arg0: i32, %arg1: i32, %arg2: i32) -> (i32, i32) {
    %c0_i32 = arith.constant 0 : i32
    return %arg2, %arg1 : i32, i32
  }
  func.func @transform_2(%arg0: i32, %arg1: i32, %arg2: i32) -> (i32, i32) {
    %c0_i32 = arith.constant 0 : i32
    %c0_i32_0 = arith.constant 0 : i32
    return %c0_i32, %arg1 : i32, i32
  }
  func.func @transform_3(%arg0: i32, %arg1: i32, %arg2: i32) -> (i32, i32) {
    %c0_i32 = arith.constant 0 : i32
    return %arg0, %arg1 : i32, i32
  }
}

</mosaic_0001>

<llo_original>
// kernel: tpu_custom_call.1
$region0: #{tpu_custom_call.1}
  #allocation0 [shape = 'u32[]', space=smem, size = 0x4, offset = 0x4, fixed_abs, tag = 'smem constant byte address 0x4 - core index']
  #allocation1 [shape = 'u32[144,128]{1,0:T(1,128)}', space=vmem, size = 0x12000, scoped, tag = 'internal scratch']
  #allocation2 [shape = 'f32[16,96]{1,0:T(8,128)}', space=vmem, size = 0x2000, scoped, tag = 'scratch operand']
  %s0 = inlined_call_operand.hbm [shape: f32[16,32], index: 0, kind: input, shape index: {}]
  %s1 = inlined_call_operand.hbm [shape: f32[32,96], index: 1, kind: input, shape index: {}]
  %s2 = inlined_call_operand.vmem [shape: f32[1,96], index: 2, kind: input, shape index: {}]
  %s3 = inlined_call_operand.hbm [shape: f32[16,96], index: 3, kind: output, shape index: {}]
  %s4 = sld [smem:[#allocation0]]
  $region38: #{tpu_custom_call.1} parent=0
    _
  %s6 = ssub.s32 1, %s4
  %s7 = scalar_select 0, %s6, %s4
  $region1: #{tpu_custom_call.1} parent=0
    #allocation3 [shape = 'u8[8192]{0}', space=vmem, size = 0x2000, scoped, tag = 'input window, operand 0, single buffered']
    #allocation4 [shape = 's32[1]{0}', space=sflag, size = 0x4, scoped, tag = 'scoped memory for tpu_custom_call.1']
    #allocation5 [shape = 's32[1]{0}', space=sflag, size = 0x4, scoped, tag = 'scoped memory for tpu_custom_call.1']
    #allocation6 [shape = 'u8[16384]{0}', space=vmem, size = 0x4000, scoped, tag = 'input window, operand 1, single buffered']
    #allocation7 [shape = 's32[1]{0}', space=sflag, size = 0x4, scoped, tag = 'scoped memory for tpu_custom_call.1']
    #allocation8 [shape = 'u8[8192]{0}', space=vmem, size = 0x2000, scoped, tag = 'output window, operand 0, single buffered']
    %8 = vsyncpa [#allocation4], 0
    %9 = vsyncpa [#allocation7], 0
    %10 = vsyncpa [#allocation5], 0
    // Predicated region
    $region2: #{tpu_custom_call.1} parent=1 // pred_check
      _
    $region3: #{tpu_custom_call.1} parent=1 // pred_check_branch
      %12 = sbr.rel (0) target = $region5
    $region4: #{tpu_custom_call.1} parent=1 // pred_region
      %s14 = ssub.s32 256, 256
      %15 = vsyncadd [#allocation4], %s14
      %s16 = sshll.u32 [#allocation3], 4
      %s17 = int_to_ptr.vmem [resolvable:$true] %s16
      %22 = dma.hbm_to_vmem [thread:$0]  %s0, 256, %s17, [#allocation4], 128, 128, 8
    $region5: #{tpu_custom_call.1} parent=1 // pred_fallthru
      _
    // Predicated region
    $region6: #{tpu_custom_call.1} parent=1 // pred_check
      _
    $region7: #{tpu_custom_call.1} parent=1 // pred_check_branch
      %24 = sbr.rel (0) target = $region9
    $region8: #{tpu_custom_call.1} parent=1 // pred_region
      %s26 = ssub.s32 512, 512
      %27 = vsyncadd [#allocation7], %s26
      %s28 = sshll.u32 [#allocation6], 4
      %s29 = int_to_ptr.vmem [resolvable:$true] %s28
      %34 = dma.hbm_to_vmem [thread:$0]  %s1, 512, %s29, [#allocation7], 128, 128, 8
    $region9: #{tpu_custom_call.1} parent=1 // pred_fallthru
      _
    // Predicated region
    $region10: #{tpu_custom_call.1} parent=1 // pred_check
      _
    $region11: #{tpu_custom_call.1} parent=1 // pred_check_branch
      %36 = sbr.rel (0) target = $region13
    $region12: #{tpu_custom_call.1} parent=1 // pred_region
      _
    $region13: #{tpu_custom_call.1} parent=1 // pred_fallthru
      _
    // Predicated region
    $region14: #{tpu_custom_call.1} parent=1 // pred_check
      _
    $region15: #{tpu_custom_call.1} parent=1 // pred_check_branch
      %38 = sbr.rel (0) target = $region17
    $region16: #{tpu_custom_call.1} parent=1 // pred_region
      %39 = dma.done [#allocation4], 256
    $region17: #{tpu_custom_call.1} parent=1 // pred_fallthru
      _
    // Predicated region
    $region18: #{tpu_custom_call.1} parent=1 // pred_check
      _
    $region19: #{tpu_custom_call.1} parent=1 // pred_check_branch
      %41 = sbr.rel (0) target = $region21
    $region20: #{tpu_custom_call.1} parent=1 // pred_region
      %42 = dma.done [#allocation7], 512
    $region21: #{tpu_custom_call.1} parent=1 // pred_fallthru
      _
    %p43 = scmp.eq.s32.totalorder 0, 0
    // Predicated region
    $region22: #{tpu_custom_call.1} parent=1 // pred_check
      %p44 = pneg %p43
    $region23: #{tpu_custom_call.1} parent=1 // pred_check_branch
      %46 = sbr.rel (%p44) target = $region25
    $region24: #{tpu_custom_call.1} parent=1 // pred_region
      %vm47 = vcmask 785408
      %48 = vst.msk [vmem:[#allocation2] sm:$0xff] %vm47, 0.0
      %49 = vst.msk [vmem:[#allocation2 + $0x8] sm:$0xff] %vm47, 0.0
    $region25: #{tpu_custom_call.1} parent=1 // pred_fallthru
      _
    %v50 = vld [vmem:[#allocation2] sm:$0xff]
    %v51 = vld [vmem:[#allocation2 + $0x8] sm:$0xff]
    %v52 = vld [vmem:[#allocation3] sm:$0xff]
    %v53 = vld [vmem:[#allocation3 + $0x8] sm:$0xff]
    %v54 = vld [vmem:[#allocation6] sm:$0xff]
    %v55 = vld [vmem:[#allocation6 + $0x8] sm:$0xff]
    %v56 = vld [vmem:[#allocation6 + $0x10] sm:$0xff]
    %v57 = vld [vmem:[#allocation6 + $0x18] sm:$0xff]
    %vm58 = vcmask 261120
    %v60 = vsel %vm58, %v52, 0
    %v63 = vsel %vm58, %v53, 0
    %65 = vmatprep.subr.mxu0 0.0
    %66 = vmatpush1.msra.mxu0 0.0
    %67 = vmatprep.subr.mxu0 0.0
    %68 = vmatpush1.msra.mxu0 0.0
    %69 = vmatprep.subr.mxu0 0.0
    %70 = vmatpush1.msra.mxu0 0.0
    %71 = vmatprep.subr.mxu0 0.0
    %72 = vmatpush1.msra.mxu0 0.0
    %73 = vmatprep.subr.mxu0 0.0
    %74 = vmatpush1.msra.mxu0 0.0
    %75 = vmatprep.subr.mxu0 0.0
    %76 = vmatpush1.msra.mxu0 0.0
    %77 = vmatprep.subr.mxu0 0.0
    %78 = vmatpush1.msra.mxu0 0.0
    %79 = vmatprep.subr.mxu0 0.0
    %80 = vmatpush1.msra.mxu0 0.0
    %81 = vmatprep.subr.mxu0 0.0
    %82 = vmatpush1.msra.mxu0 0.0
    %83 = vmatprep.subr.mxu0 0.0
    %84 = vmatpush1.msra.mxu0 0.0
    %85 = vmatprep.subr.mxu0 0.0
    %86 = vmatpush1.msra.mxu0 0.0
    %87 = vmatprep.subr.mxu0 0.0
    %88 = vmatpush1.msra.mxu0 0.0
    %89 = vmatprep.subr.mxu0 0.0
    %90 = vmatpush1.msra.mxu0 %v57
    %91 = vmatprep.subr.mxu0 0.0
    %92 = vmatpush1.msra.mxu0 %v56
    %93 = vmatprep.subr.mxu0 0.0
    %94 = vmatpush1.msra.mxu0 %v55
    %95 = vmatprep.subr.mxu0 0.0
    %96 = vmatpush1.msra.mxu0 %v54
    %97 = vmatprep.subr.mxu0 0.0
    %98 = vmatpush2.msra.mxu0 0.0
    %99 = vmatprep.subr.mxu0 0.0
    %100 = vmatpush2.msra.mxu0 0.0
    %101 = vmatprep.subr.mxu0 0.0
    %102 = vmatpush2.msra.mxu0 0.0
    %103 = vmatprep.subr.mxu0 0.0
    %104 = vmatpush2.msra.mxu0 0.0
    %105 = vmatprep.subr.mxu0 0.0
    %106 = vmatpush2.msra.mxu0 0.0
    %107 = vmatprep.subr.mxu0 0.0
    %108 = vmatpush2.msra.mxu0 0.0
    %109 = vmatprep.subr.mxu0 0.0
    %110 = vmatpush2.msra.mxu0 0.0
    %111 = vmatprep.subr.mxu0 0.0
    %112 = vmatpush2.msra.mxu0 0.0
    %113 = vmatprep.subr.mxu0 0.0
    %114 = vmatpush2.msra.mxu0 0.0
    %115 = vmatprep.subr.mxu0 0.0
    %116 = vmatpush2.msra.mxu0 0.0
    %117 = vmatprep.subr.mxu0 0.0
    %118 = vmatpush2.msra.mxu0 0.0
    %119 = vmatprep.subr.mxu0 0.0
    %120 = vmatpush2.msra.mxu0 0.0
    %121 = vmatprep.subr.mxu0 0.0
    %122 = vmatpush2.msra.mxu0 0.0
    %123 = vmatprep.subr.mxu0 0.0
    %124 = vmatpush2.msra.mxu0 0.0
    %125 = vmatprep.subr.mxu0 0.0
    %126 = vmatpush2.msra.mxu0 0.0
    %127 = vmatprep.subr.mxu0 0.0
    %128 = vmatpush2.msra.mxu0 0.0
    %129 = vmatprep.mubr.f32.mxu0 0.0
    %130 = vmatmul.mubr.f32.gmra.mxu0 %v60
    %v131 = vpop.f32.mrf.mxu0
    %v132 = vadd.f32 0.0, %v131
    %v133 = vpop.f32.mrf.mxu0
    %134 = vmatprep.mubr.f32.mxu0 0.0
    %135 = vmatmul.mubr.f32.gmra.mxu0 %v63
    %v136 = vpop.f32.mrf.mxu0
    %v137 = vadd.f32 0.0, %v136
    %v138 = vpop.f32.mrf.mxu0
    %139 = vdwg.mxu0
    %v140 = vadd.f32 %v50, %v132
    %v141 = vadd.f32 %v51, %v137
    %vm142 = vcmask 785408
    %143 = vst.msk [vmem:[#allocation2] sm:$0xff] %vm142, %v140
    %144 = vst.msk [vmem:[#allocation2 + $0x8] sm:$0xff] %vm142, %v141
    // Predicated region
    $region26: #{tpu_custom_call.1} parent=1 // pred_check
      %p145 = pneg %p43
    $region27: #{tpu_custom_call.1} parent=1 // pred_check_branch
      %147 = sbr.rel (%p145) target = $region29
    $region28: #{tpu_custom_call.1} parent=1 // pred_region
      %v148 = vld [vmem:[#allocation2] sm:$0xff]
      %v149 = vld [vmem:[#allocation2 + $0x8] sm:$0xff]
      %v150 = vld [vmem:[%s2] sm:$0x1]
      %v152 = vlaneseq
      %v153 = vshrl.u32 %v152, 7
      %v154 = vsub.s32 0, %v153
      %v155 = vrot.slane %v150, %v154
      %v157 = vadd.f32 %v148, %v155
      %v158 = vadd.f32 %v149, %v155
      %159 = vst.msk [vmem:[#allocation8] sm:$0xff] %vm142, %v157
      %160 = vst.msk [vmem:[#allocation8 + $0x8] sm:$0xff] %vm142, %v158
    $region29: #{tpu_custom_call.1} parent=1 // pred_fallthru
      _
    // Predicated region
    $region30: #{tpu_custom_call.1} parent=1 // pred_check
      _
    $region31: #{tpu_custom_call.1} parent=1 // pred_check_branch
      %162 = sbr.rel (0) target = $region33
    $region32: #{tpu_custom_call.1} parent=1 // pred_region
      %s164 = ssub.s32 256, 256
      %165 = vsyncadd [#allocation5], %s164
      %s166 = sshll.u32 [#allocation8], 4
      %s167 = int_to_ptr.vmem [resolvable:$true] %s166
      %172 = dma.vmem_to_hbm [thread:$0]  %s167, 256, %s3, [#allocation5], 128, 128, 8
    $region33: #{tpu_custom_call.1} parent=1 // pred_fallthru
      _
    // Predicated region
    $region34: #{tpu_custom_call.1} parent=1 // pred_check
      _
    $region35: #{tpu_custom_call.1} parent=1 // pred_check_branch
      %174 = sbr.rel (0) target = $region37
    $region36: #{tpu_custom_call.1} parent=1 // pred_region
      %175 = dma.done [#allocation5], 256
    $region37: #{tpu_custom_call.1} parent=1 // pred_fallthru
      _
    %176 = vsyncpa [#allocation4], 1
    %177 = vsyncpa [#allocation7], 1
    %178 = vsyncpa [#allocation5], 1

</llo_original>
